<compile_context>
chip_gen: v5e
topology: v5e:2x2
jax: 0.10.0
libtpu: 0.0.40
codegen_flags: <defaults>
</compile_context>

<pallas_src>
import math

import jax
import jax.numpy as jnp
from jax.experimental import pallas as pl
from jax.experimental.pallas import tpu as pltpu


def _linear_bias_kernel(x_ref, w_ref, b_ref, o_ref, acc_ref):
    # x_ref: (tm, tk)   w_ref: (tk, tn)   b_ref: (1, tn)   o_ref: (tm, tn)
    k = pl.program_id(2)

    @pl.when(k == 0)
    def _():
        acc_ref[...] = jnp.zeros_like(acc_ref)

    acc_ref[...] += jnp.dot(
        x_ref[...], w_ref[...], preferred_element_type=jnp.float32
    )

    @pl.when(k == pl.num_programs(2) - 1)
    def _():
        o_ref[...] = (acc_ref[...] + b_ref[...].astype(jnp.float32)).astype(
            o_ref.dtype
        )


def linear_projection(x, weight, bias, *, tm=128, tn=128, tk=256):
    """Forward of LinearProjection (eval mode): y = x @ weight + bias.

    x:      (B, N, K)  -- batch of N patch vectors of length K (= patch_dim)
    weight: (K, D)     -- projection weight, already transposed from PyTorch (D, K)
    bias:   (D,)
    returns (B, N, D)
    """
    B, N, K = x.shape
    K2, D = weight.shape
    assert K == K2, (K, K2)
    assert bias.shape == (D,)
    M = B * N

    tm = min(tm, M)
    tn = min(tn, D)
    tk = min(tk, K)
    # TPU (8,128) tiling constraints on the f32 blocks.
    assert M % tm == 0 and (tm % 8 == 0 or tm == M), (M, tm)
    assert D % tn == 0 and (tn % 128 == 0 or tn == D), (D, tn)
    assert K % tk == 0 and (tk % 128 == 0 or tk == K), (K, tk)

    x2 = x.reshape(M, K)        # contiguous flatten: free, no HBM round-trip
    b2 = bias.reshape(1, D)

    out = pl.pallas_call(
        _linear_bias_kernel,
        out_shape=jax.ShapeDtypeStruct((M, D), x.dtype),
        grid_spec=pltpu.PrefetchScalarGridSpec(
            num_scalar_prefetch=0,
            grid=(M // tm, D // tn, K // tk),
            in_specs=[
                pl.BlockSpec((tm, tk), lambda i, j, k: (i, k)),   # x tile
                pl.BlockSpec((tk, tn), lambda i, j, k: (k, j)),   # weight tile
                pl.BlockSpec((1, tn), lambda i, j, k: (0, j)),    # bias tile
            ],
            out_specs=pl.BlockSpec((tm, tn), lambda i, j, k: (i, j)),
            scratch_shapes=[pltpu.VMEM((tm, tn), jnp.float32)],
        ),
        compiler_params=pltpu.CompilerParams(
            dimension_semantics=("parallel", "parallel", "arbitrary")
        ),
    )(x2, weight, b2)

    # TODO(synk): training-mode nn.Dropout (stochastic mask + 1/(1-p) scaling) not
    # implemented; eval-mode dropout is the identity, which is what we return.
    return out.reshape(B, N, D)


def _reference(x, weight, bias):
    """Pure-JAX reference: nn.Linear forward (eval-mode dropout = identity)."""
    return jnp.einsum("bnk,kd->bnd", x, weight) + bias[None, None, :]


if __name__ == "__main__":
    # Small shapes consistent with the module:
    #   batch=2, n_patches=64 (e.g. 32x32 image, patch 4),
    #   patch_dim=256 (e.g. channels=16 * 4*4), dim=128.
    B, N, K, D = 2, 64, 256, 128

    key = jax.random.PRNGKey(0)
    kx, kw, kb = jax.random.split(key, 3)

    x = jax.random.normal(kx, (B, N, K), dtype=jnp.float32)

    # Xavier-uniform weight (as in the module), stored pre-transposed as (K, D).
    bound = math.sqrt(6.0 / (K + D))
    weight = jax.random.uniform(kw, (K, D), dtype=jnp.float32,
                                minval=-bound, maxval=bound)
    # Module inits bias to zeros; use a nonzero bias here so the bias path is
    # actually exercised / verified (forward semantics are identical).
    bias = 0.1 * jax.random.normal(kb, (D,), dtype=jnp.float32)

    out = linear_projection(x, weight, bias)
    out = jax.block_until_ready(out)

    ref = _reference(x, weight, bias)
    assert out.shape == (B, N, D), out.shape
    assert jnp.allclose(out, ref, atol=1e-2, rtol=1e-2), (
        float(jnp.max(jnp.abs(out - ref)))
    )

    print("KERNEL_OK")
</pallas_src>

<mosaic_0001>
module attributes {stable_mosaic.version = 11 : i64} {
  func.func @_linear_bias_kernel(%arg0: i32, %arg1: i32, %arg2: i32, %arg3: memref<128x256xf32, #tpu.memory_space<vmem>>, %arg4: memref<256x128xf32, #tpu.memory_space<vmem>>, %arg5: memref<1x128xf32, #tpu.memory_space<vmem>>, %arg6: memref<128x128xf32, #tpu.memory_space<vmem>>, %arg7: memref<128x128xf32, #tpu.memory_space<vmem>>) attributes {dimension_semantics = [#tpu.dimension_semantics<parallel>, #tpu.dimension_semantics<parallel>, #tpu.dimension_semantics<arbitrary>], iteration_bounds = array<i64: 1, 1, 1>, scalar_prefetch = 0 : i64, scratch_operands = 1 : i64, tpu.core_type = #tpu.core_type<tc>, window_params = [{transform_indices = @transform_0, window_bounds = array<i64: 128, 256>}, {transform_indices = @transform_1, window_bounds = array<i64: 256, 128>}, {transform_indices = @transform_2, window_bounds = array<i64: 1, 128>}, {transform_indices = @transform_3, window_bounds = array<i64: 128, 128>}]} {
    %c0_i32 = arith.constant 0 : i32
    %0 = arith.cmpi eq, %arg2, %c0_i32 : i32
    %1 = arith.extui %0 : i1 to i32
    %c0_i32_0 = arith.constant 0 : i32
    %2 = arith.cmpi ne, %1, %c0_i32_0 : i32
    scf.if %2 {
      %cst_10 = arith.constant 0.000000e+00 : f32
      %12 = vector.broadcast %cst_10 : f32 to vector<128x128xf32>
      %c0_11 = arith.constant 0 : index
      %c0_12 = arith.constant 0 : index
      %13 = vector.load %arg7[%c0_11, %c0_12] : memref<128x128xf32, #tpu.memory_space<vmem>>, vector<128x128xf32>
      tpu.vector_store %arg7[%c0_11, %c0_12], %12 {strides = array<i32>} : memref<128x128xf32, #tpu.memory_space<vmem>>, vector<128x128xf32>,
    } else {
    }
    %c0 = arith.constant 0 : index
    %c0_1 = arith.constant 0 : index
    %3 = vector.load %arg7[%c0, %c0_1] : memref<128x128xf32, #tpu.memory_space<vmem>>, vector<128x128xf32>
    %c0_2 = arith.constant 0 : index
    %c0_3 = arith.constant 0 : index
    %4 = vector.load %arg3[%c0_2, %c0_3] : memref<128x256xf32, #tpu.memory_space<vmem>>, vector<128x256xf32>
    %c0_4 = arith.constant 0 : index
    %c0_5 = arith.constant 0 : index
    %5 = vector.load %arg4[%c0_4, %c0_5] : memref<256x128xf32, #tpu.memory_space<vmem>>, vector<256x128xf32>
    %cst = arith.constant dense<0.000000e+00> : vector<128x128xf32>
    %6 = tpu.matmul %4, %5, %cst {dimension_numbers = #tpu.dot_dimension_numbers<[1], [0], [0], [1], [0, 0, 1, 1], [], []>} : vector<128x256xf32>, vector<256x128xf32>, vector<128x128xf32> -> vector<128x128xf32>
    %7 = arith.addf %3, %6 : vector<128x128xf32>
    %c0_6 = arith.constant 0 : index
    %c0_7 = arith.constant 0 : index
    %8 = vector.load %arg7[%c0_6, %c0_7] : memref<128x128xf32, #tpu.memory_space<vmem>>, vector<128x128xf32>
    tpu.vector_store %arg7[%c0_6, %c0_7], %7 {strides = array<i32>} : memref<128x128xf32, #tpu.memory_space<vmem>>, vector<128x128xf32>,
    %c0_i32_8 = arith.constant 0 : i32
    %9 = arith.cmpi eq, %arg2, %c0_i32_8 : i32
    %10 = arith.extui %9 : i1 to i32
    %c0_i32_9 = arith.constant 0 : i32
    %11 = arith.cmpi ne, %10, %c0_i32_9 : i32
    scf.if %11 {
      %c0_10 = arith.constant 0 : index
      %c0_11 = arith.constant 0 : index
      %12 = vector.load %arg7[%c0_10, %c0_11] : memref<128x128xf32, #tpu.memory_space<vmem>>, vector<128x128xf32>
      %c0_12 = arith.constant 0 : index
      %c0_13 = arith.constant 0 : index
      %13 = vector.load %arg5[%c0_12, %c0_13] : memref<1x128xf32, #tpu.memory_space<vmem>>, vector<1x128xf32>
      %14 = vector.broadcast %13 : vector<1x128xf32> to vector<128x128xf32>
      %15 = arith.addf %12, %14 : vector<128x128xf32>
      %c0_14 = arith.constant 0 : index
      %c0_15 = arith.constant 0 : index
      %16 = vector.load %arg6[%c0_14, %c0_15] : memref<128x128xf32, #tpu.memory_space<vmem>>, vector<128x128xf32>
      tpu.vector_store %arg6[%c0_14, %c0_15], %15 {strides = array<i32>} : memref<128x128xf32, #tpu.memory_space<vmem>>, vector<128x128xf32>,
    } else {
    }
    return
  }
  func.func @transform_0(%arg0: i32, %arg1: i32, %arg2: i32) -> (i32, i32) {
    %c0_i32 = arith.constant 0 : i32
    return %arg0, %arg2 : i32, i32
  }
  func.func @transform_1(%arg0: i32, %arg1: i32, %arg2: i32) -> (i32, i32) {
    %c0_i32 = arith.constant 0 : i32
    return %arg2, %arg1 : i32, i32
  }
  func.func @transform_2(%arg0: i32, %arg1: i32, %arg2: i32) -> (i32, i32) {
    %c0_i32 = arith.constant 0 : i32
    %c0_i32_0 = arith.constant 0 : i32
    return %c0_i32, %arg1 : i32, i32
  }
  func.func @transform_3(%arg0: i32, %arg1: i32, %arg2: i32) -> (i32, i32) {
    %c0_i32 = arith.constant 0 : i32
    return %arg0, %arg1 : i32, i32
  }
}

</mosaic_0001>

<llo_original>
// kernel: tpu_custom_call.1
$region0: #{tpu_custom_call.1}
  #allocation0 [shape = 'u32[]', space=smem, size = 0x4, offset = 0x4, fixed_abs, tag = 'smem constant byte address 0x4 - core index']
  #allocation1 [shape = 'u32[72,128]{1,0:T(1,128)}', space=vmem, size = 0x9000, scoped, tag = 'internal scratch']
  #allocation2 [shape = 'f32[128,128]{1,0:T(8,128)}', space=vmem, size = 0x10000, scoped, tag = 'scratch operand']
  %s0 = inlined_call_operand.hbm [shape: f32[128,256], index: 0, kind: input, shape index: {}]
  %s1 = inlined_call_operand.hbm [shape: f32[256,128], index: 1, kind: input, shape index: {}]
  %s2 = inlined_call_operand.vmem [shape: f32[1,128], index: 2, kind: input, shape index: {}]
  %s3 = inlined_call_operand.hbm [shape: f32[128,128], index: 3, kind: output, shape index: {}]
  %s4 = sld [smem:[#allocation0]]
  $region38: #{tpu_custom_call.1} parent=0
    _
  %s6 = ssub.s32 1, %s4
  %s7 = scalar_select 0, %s6, %s4
  $region1: #{tpu_custom_call.1} parent=0
    #allocation3 [shape = 'u8[131072]{0}', space=vmem, size = 0x20000, scoped, tag = 'input window, operand 0, single buffered']
    #allocation4 [shape = 's32[1]{0}', space=sflag, size = 0x4, scoped, tag = 'scoped memory for tpu_custom_call.1']
    #allocation5 [shape = 's32[1]{0}', space=sflag, size = 0x4, scoped, tag = 'scoped memory for tpu_custom_call.1']
    #allocation6 [shape = 'u8[131072]{0}', space=vmem, size = 0x20000, scoped, tag = 'input window, operand 1, single buffered']
    #allocation7 [shape = 's32[1]{0}', space=sflag, size = 0x4, scoped, tag = 'scoped memory for tpu_custom_call.1']
    #allocation8 [shape = 'u8[65536]{0}', space=vmem, size = 0x10000, scoped, tag = 'output window, operand 0, single buffered']
    %8 = vsyncpa [#allocation4], 0
    %9 = vsyncpa [#allocation7], 0
    %10 = vsyncpa [#allocation5], 0
    // Predicated region
    $region2: #{tpu_custom_call.1} parent=1 // pred_check
      _
    $region3: #{tpu_custom_call.1} parent=1 // pred_check_branch
      %12 = sbr.rel (0) target = $region5
    $region4: #{tpu_custom_call.1} parent=1 // pred_region
      %14 = vsyncadd [#allocation4], 0
      %s15 = sshll.u32 %s0, 4
      %s16 = int_to_ptr.hbm [resolvable:$true] %s15
      %s17 = sshll.u32 [#allocation3], 4
      %s18 = int_to_ptr.vmem [resolvable:$true] %s17
      %23 = dma.hbm_to_vmem [thread:$0]  %s16, 4096, %s18, [#allocation4], 256, 256, 16
    $region5: #{tpu_custom_call.1} parent=1 // pred_fallthru
      _
    // Predicated region
    $region6: #{tpu_custom_call.1} parent=1 // pred_check
      _
    $region7: #{tpu_custom_call.1} parent=1 // pred_check_branch
      %25 = sbr.rel (0) target = $region9
    $region8: #{tpu_custom_call.1} parent=1 // pred_region
      %27 = vsyncadd [#allocation7], 0
      %s28 = sshll.u32 %s1, 4
      %s29 = int_to_ptr.hbm [resolvable:$true] %s28
      %s30 = sshll.u32 [#allocation6], 4
      %s31 = int_to_ptr.vmem [resolvable:$true] %s30
      %36 = dma.hbm_to_vmem [thread:$0]  %s29, 4096, %s31, [#allocation7], 128, 128, 8
    $region9: #{tpu_custom_call.1} parent=1 // pred_fallthru
      _
    // Predicated region
    $region10: #{tpu_custom_call.1} parent=1 // pred_check
      _
    $region11: #{tpu_custom_call.1} parent=1 // pred_check_branch
      %38 = sbr.rel (0) target = $region13
    $region12: #{tpu_custom_call.1} parent=1 // pred_region
      _
    $region13: #{tpu_custom_call.1} parent=1 // pred_fallthru
      _
    // Predicated region
    $region14: #{tpu_custom_call.1} parent=1 // pred_check
      _
    $region15: #{tpu_custom_call.1} parent=1 // pred_check_branch
      %40 = sbr.rel (0) target = $region17
    $region16: #{tpu_custom_call.1} parent=1 // pred_region
      %42 = dma.done [#allocation4], 4096
    $region17: #{tpu_custom_call.1} parent=1 // pred_fallthru
      _
    // Predicated region
    $region18: #{tpu_custom_call.1} parent=1 // pred_check
      _
    $region19: #{tpu_custom_call.1} parent=1 // pred_check_branch
      %44 = sbr.rel (0) target = $region21
    $region20: #{tpu_custom_call.1} parent=1 // pred_region
      %46 = dma.done [#allocation7], 4096
    $region21: #{tpu_custom_call.1} parent=1 // pred_fallthru
      _
    %p47 = scmp.eq.s32.totalorder 0, 0
    // Predicated region
    $region22: #{tpu_custom_call.1} parent=1 // pred_check
      %p48 = pneg %p47
    $region23: #{tpu_custom_call.1} parent=1 // pred_check_branch
      %50 = sbr.rel (%p48) target = $region25
    $region24: #{tpu_custom_call.1} parent=1 // pred_region
      %51 = vst [vmem:[#allocation2] sm:$0xff] 0.0
      %52 = vst [vmem:[#allocation2 + $0x8] sm:$0xff] 0.0
      %53 = vst [vmem:[#allocation2 + $0x10] sm:$0xff] 0.0
      %54 = vst [vmem:[#allocation2 + $0x18] sm:$0xff] 0.0
      %55 = vst [vmem:[#allocation2 + $0x20] sm:$0xff] 0.0
      %56 = vst [vmem:[#allocation2 + $0x28] sm:$0xff] 0.0
      %57 = vst [vmem:[#allocation2 + $0x30] sm:$0xff] 0.0
      %58 = vst [vmem:[#allocation2 + $0x38] sm:$0xff] 0.0
      %59 = vst [vmem:[#allocation2 + $0x40] sm:$0xff] 0.0
      %60 = vst [vmem:[#allocation2 + $0x48] sm:$0xff] 0.0
      %61 = vst [vmem:[#allocation2 + $0x50] sm:$0xff] 0.0
      %62 = vst [vmem:[#allocation2 + $0x58] sm:$0xff] 0.0
      %63 = vst [vmem:[#allocation2 + $0x60] sm:$0xff] 0.0
      %64 = vst [vmem:[#allocation2 + $0x68] sm:$0xff] 0.0
      %65 = vst [vmem:[#allocation2 + $0x70] sm:$0xff] 0.0
      %66 = vst [vmem:[#allocation2 + $0x78] sm:$0xff] 0.0
    $region25: #{tpu_custom_call.1} parent=1 // pred_fallthru
      _
    %v67 = vld [vmem:[#allocation2] sm:$0xff]
    %v68 = vld [vmem:[#allocation2 + $0x8] sm:$0xff]
    %v69 = vld [vmem:[#allocation2 + $0x10] sm:$0xff]
    %v70 = vld [vmem:[#allocation2 + $0x18] sm:$0xff]
    %v71 = vld [vmem:[#allocation2 + $0x20] sm:$0xff]
    %v72 = vld [vmem:[#allocation2 + $0x28] sm:$0xff]
    %v73 = vld [vmem:[#allocation2 + $0x30] sm:$0xff]
    %v74 = vld [vmem:[#allocation2 + $0x38] sm:$0xff]
    %v75 = vld [vmem:[#allocation2 + $0x40] sm:$0xff]
    %v76 = vld [vmem:[#allocation2 + $0x48] sm:$0xff]
    %v77 = vld [vmem:[#allocation2 + $0x50] sm:$0xff]
    %v78 = vld [vmem:[#allocation2 + $0x58] sm:$0xff]
    %v79 = vld [vmem:[#allocation2 + $0x60] sm:$0xff]
    %v80 = vld [vmem:[#allocation2 + $0x68] sm:$0xff]
    %v81 = vld [vmem:[#allocation2 + $0x70] sm:$0xff]
    %v82 = vld [vmem:[#allocation2 + $0x78] sm:$0xff]
    %v83 = vld [vmem:[#allocation3] sm:$0xff]
    %v84 = vld [vmem:[#allocation3 + $0x8] sm:$0xff]
    %v85 = vld [vmem:[#allocation3 + $0x10] sm:$0xff]
    %v86 = vld [vmem:[#allocation3 + $0x18] sm:$0xff]
    %v87 = vld [vmem:[#allocation3 + $0x20] sm:$0xff]
    %v88 = vld [vmem:[#allocation3 + $0x28] sm:$0xff]
    %v89 = vld [vmem:[#allocation3 + $0x30] sm:$0xff]
    %v90 = vld [vmem:[#allocation3 + $0x38] sm:$0xff]
    %v91 = vld [vmem:[#allocation3 + $0x40] sm:$0xff]
    %v92 = vld [vmem:[#allocation3 + $0x48] sm:$0xff]
    %v93 = vld [vmem:[#allocation3 + $0x50] sm:$0xff]
    %v94 = vld [vmem:[#allocation3 + $0x58] sm:$0xff]
    %v95 = vld [vmem:[#allocation3 + $0x60] sm:$0xff]
    %v96 = vld [vmem:[#allocation3 + $0x68] sm:$0xff]
    %v97 = vld [vmem:[#allocation3 + $0x70] sm:$0xff]
    %v98 = vld [vmem:[#allocation3 + $0x78] sm:$0xff]
    %v99 = vld [vmem:[#allocation3 + $0x80] sm:$0xff]
    %v100 = vld [vmem:[#allocation3 + $0x88] sm:$0xff]
    %v101 = vld [vmem:[#allocation3 + $0x90] sm:$0xff]
    %v102 = vld [vmem:[#allocation3 + $0x98] sm:$0xff]
    %v103 = vld [vmem:[#allocation3 + $0xa0] sm:$0xff]
    %v104 = vld [vmem:[#allocation3 + $0xa8] sm:$0xff]
    %v105 = vld [vmem:[#allocation3 + $0xb0] sm:$0xff]
    %v106 = vld [vmem:[#allocation3 + $0xb8] sm:$0xff]
    %v107 = vld [vmem:[#allocation3 + $0xc0] sm:$0xff]
    %v108 = vld [vmem:[#allocation3 + $0xc8] sm:$0xff]
    %v109 = vld [vmem:[#allocation3 + $0xd0] sm:$0xff]
    %v110 = vld [vmem:[#allocation3 + $0xd8] sm:$0xff]
    %v111 = vld [vmem:[#allocation3 + $0xe0] sm:$0xff]
    %v112 = vld [vmem:[#allocation3 + $0xe8] sm:$0xff]
    %v113 = vld [vmem:[#allocation3 + $0xf0] sm:$0xff]
    %v114 = vld [vmem:[#allocation3 + $0xf8] sm:$0xff]
    %v115 = vld [vmem:[#allocation6] sm:$0xff]
    %v116 = vld [vmem:[#allocation6 + $0x8] sm:$0xff]
    %v117 = vld [vmem:[#allocation6 + $0x10] sm:$0xff]
    %v118 = vld [vmem:[#allocation6 + $0x18] sm:$0xff]
    %v119 = vld [vmem:[#allocation6 + $0x20] sm:$0xff]
    %v120 = vld [vmem:[#allocation6 + $0x28] sm:$0xff]
    %v121 = vld [vmem:[#allocation6 + $0x30] sm:$0xff]
    %v122 = vld [vmem:[#allocation6 + $0x38] sm:$0xff]
    %v123 = vld [vmem:[#allocation6 + $0x40] sm:$0xff]
    %v124 = vld [vmem:[#allocation6 + $0x48] sm:$0xff]
    %v125 = vld [vmem:[#allocation6 + $0x50] sm:$0xff]
    %v126 = vld [vmem:[#allocation6 + $0x58] sm:$0xff]
    %v127 = vld [vmem:[#allocation6 + $0x60] sm:$0xff]
    %v128 = vld [vmem:[#allocation6 + $0x68] sm:$0xff]
    %v129 = vld [vmem:[#allocation6 + $0x70] sm:$0xff]
    %v130 = vld [vmem:[#allocation6 + $0x78] sm:$0xff]
    %v131 = vld [vmem:[#allocation6 + $0x80] sm:$0xff]
    %v132 = vld [vmem:[#allocation6 + $0x88] sm:$0xff]
    %v133 = vld [vmem:[#allocation6 + $0x90] sm:$0xff]
    %v134 = vld [vmem:[#allocation6 + $0x98] sm:$0xff]
    %v135 = vld [vmem:[#allocation6 + $0xa0] sm:$0xff]
    %v136 = vld [vmem:[#allocation6 + $0xa8] sm:$0xff]
    %v137 = vld [vmem:[#allocation6 + $0xb0] sm:$0xff]
    %v138 = vld [vmem:[#allocation6 + $0xb8] sm:$0xff]
    %v139 = vld [vmem:[#allocation6 + $0xc0] sm:$0xff]
    %v140 = vld [vmem:[#allocation6 + $0xc8] sm:$0xff]
    %v141 = vld [vmem:[#allocation6 + $0xd0] sm:$0xff]
    %v142 = vld [vmem:[#allocation6 + $0xd8] sm:$0xff]
    %v143 = vld [vmem:[#allocation6 + $0xe0] sm:$0xff]
    %v144 = vld [vmem:[#allocation6 + $0xe8] sm:$0xff]
    %v145 = vld [vmem:[#allocation6 + $0xf0] sm:$0xff]
    %v146 = vld [vmem:[#allocation6 + $0xf8] sm:$0xff]
    %147 = vmatpush.msra.mxu0 %v130
    %148 = vmatpush.msra.mxu0 %v129
    %149 = vmatpush.msra.mxu0 %v128
    %150 = vmatpush.msra.mxu0 %v127
    %151 = vmatpush.msra.mxu0 %v126
    %152 = vmatpush.msra.mxu0 %v125
    %153 = vmatpush.msra.mxu0 %v124
    %154 = vmatpush.msra.mxu0 %v123
    %155 = vmatpush.msra.mxu0 %v122
    %156 = vmatpush.msra.mxu0 %v121
    %157 = vmatpush.msra.mxu0 %v120
    %158 = vmatpush.msra.mxu0 %v119
    %159 = vmatpush.msra.mxu0 %v118
    %160 = vmatpush.msra.mxu0 %v117
    %161 = vmatpush.msra.mxu0 %v116
    %162 = vmatpush.msra.mxu0 %v115
    %163 = vmatmul.f32.gmra.mxu0 %v83
    %v164 = vpop.f32.mrf.mxu0
    %v165 = vadd.f32 0.0, %v164
    %166 = vmatmul.f32.gmra.mxu0 %v85
    %v167 = vpop.f32.mrf.mxu0
    %v168 = vadd.f32 0.0, %v167
    %169 = vmatmul.f32.gmra.mxu0 %v87
    %v170 = vpop.f32.mrf.mxu0
    %v171 = vadd.f32 0.0, %v170
    %172 = vmatmul.f32.gmra.mxu0 %v89
    %v173 = vpop.f32.mrf.mxu0
    %v174 = vadd.f32 0.0, %v173
    %175 = vmatmul.f32.gmra.mxu0 %v91
    %v176 = vpop.f32.mrf.mxu0
    %v177 = vadd.f32 0.0, %v176
    %178 = vmatmul.f32.gmra.mxu0 %v93
    %v179 = vpop.f32.mrf.mxu0
    %v180 = vadd.f32 0.0, %v179
    %181 = vmatmul.f32.gmra.mxu0 %v95
    %v182 = vpop.f32.mrf.mxu0
    %v183 = vadd.f32 0.0, %v182
    %184 = vmatmul.f32.gmra.mxu0 %v97
    %v185 = vpop.f32.mrf.mxu0
    %v186 = vadd.f32 0.0, %v185
    %187 = vmatmul.f32.gmra.mxu0 %v99
    %v188 = vpop.f32.mrf.mxu0
    %v189 = vadd.f32 0.0, %v188
    %190 = vmatmul.f32.gmra.mxu0 %v101
    %v191 = vpop.f32.mrf.mxu0
    %v192 = vadd.f32 0.0, %v191
    %193 = vmatmul.f32.gmra.mxu0 %v103
    %v194 = vpop.f32.mrf.mxu0
    %v195 = vadd.f32 0.0, %v194
    %196 = vmatmul.f32.gmra.mxu0 %v105
    %v197 = vpop.f32.mrf.mxu0
    %v198 = vadd.f32 0.0, %v197
    %199 = vmatmul.f32.gmra.mxu0 %v107
    %v200 = vpop.f32.mrf.mxu0
    %v201 = vadd.f32 0.0, %v200
    %202 = vmatmul.f32.gmra.mxu0 %v109
    %v203 = vpop.f32.mrf.mxu0
    %v204 = vadd.f32 0.0, %v203
    %205 = vmatmul.f32.gmra.mxu0 %v111
    %v206 = vpop.f32.mrf.mxu0
    %v207 = vadd.f32 0.0, %v206
    %208 = vmatmul.f32.gmra.mxu0 %v113
    %v209 = vpop.f32.mrf.mxu0
    %v210 = vadd.f32 0.0, %v209
    %211 = vdwg.mxu0
    %212 = vmatpush.msra.mxu0 %v146
    %213 = vmatpush.msra.mxu0 %v145
    %214 = vmatpush.msra.mxu0 %v144
    %215 = vmatpush.msra.mxu0 %v143
    %216 = vmatpush.msra.mxu0 %v142
    %217 = vmatpush.msra.mxu0 %v141
    %218 = vmatpush.msra.mxu0 %v140
    %219 = vmatpush.msra.mxu0 %v139
    %220 = vmatpush.msra.mxu0 %v138
    %221 = vmatpush.msra.mxu0 %v137
    %222 = vmatpush.msra.mxu0 %v136
    %223 = vmatpush.msra.mxu0 %v135
    %224 = vmatpush.msra.mxu0 %v134
    %225 = vmatpush.msra.mxu0 %v133
    %226 = vmatpush.msra.mxu0 %v132
    %227 = vmatpush.msra.mxu0 %v131
    %228 = vmatmul.f32.gmra.mxu0 %v84
    %v229 = vpop.f32.mrf.mxu0
    %v230 = vadd.f32 %v165, %v229
    %231 = vmatmul.f32.gmra.mxu0 %v86
    %v232 = vpop.f32.mrf.mxu0
    %v233 = vadd.f32 %v168, %v232
    %234 = vmatmul.f32.gmra.mxu0 %v88
    %v235 = vpop.f32.mrf.mxu0
    %v236 = vadd.f32 %v171, %v235
    %237 = vmatmul.f32.gmra.mxu0 %v90
    %v238 = vpop.f32.mrf.mxu0
    %v239 = vadd.f32 %v174, %v238
    %240 = vmatmul.f32.gmra.mxu0 %v92
    %v241 = vpop.f32.mrf.mxu0
    %v242 = vadd.f32 %v177, %v241
    %243 = vmatmul.f32.gmra.mxu0 %v94
    %v244 = vpop.f32.mrf.mxu0
    %v245 = vadd.f32 %v180, %v244
    %246 = vmatmul.f32.gmra.mxu0 %v96
    %v247 = vpop.f32.mrf.mxu0
    %v248 = vadd.f32 %v183, %v247
    %249 = vmatmul.f32.gmra.mxu0 %v98
    %v250 = vpop.f32.mrf.mxu0
    %v251 = vadd.f32 %v186, %v250
    %252 = vmatmul.f32.gmra.mxu0 %v100
    %v253 = vpop.f32.mrf.mxu0
    %v254 = vadd.f32 %v189, %v253
    %255 = vmatmul.f32.gmra.mxu0 %v102
    %v256 = vpop.f32.mrf.mxu0
    %v257 = vadd.f32 %v192, %v256
    %258 = vmatmul.f32.gmra.mxu0 %v104
    %v259 = vpop.f32.mrf.mxu0
    %v260 = vadd.f32 %v195, %v259
    %261 = vmatmul.f32.gmra.mxu0 %v106
    %v262 = vpop.f32.mrf.mxu0
    %v263 = vadd.f32 %v198, %v262
    %264 = vmatmul.f32.gmra.mxu0 %v108
    %v265 = vpop.f32.mrf.mxu0
    %v266 = vadd.f32 %v201, %v265
    %267 = vmatmul.f32.gmra.mxu0 %v110
    %v268 = vpop.f32.mrf.mxu0
    %v269 = vadd.f32 %v204, %v268
    %270 = vmatmul.f32.gmra.mxu0 %v112
    %v271 = vpop.f32.mrf.mxu0
    %v272 = vadd.f32 %v207, %v271
    %273 = vmatmul.f32.gmra.mxu0 %v114
    %v274 = vpop.f32.mrf.mxu0
    %v275 = vadd.f32 %v210, %v274
    %276 = vdwg.mxu0
    %v277 = vadd.f32 %v67, %v230
    %v278 = vadd.f32 %v68, %v233
    %v279 = vadd.f32 %v69, %v236
    %v280 = vadd.f32 %v70, %v239
    %v281 = vadd.f32 %v71, %v242
    %v282 = vadd.f32 %v72, %v245
    %v283 = vadd.f32 %v73, %v248
    %v284 = vadd.f32 %v74, %v251
    %v285 = vadd.f32 %v75, %v254
    %v286 = vadd.f32 %v76, %v257
    %v287 = vadd.f32 %v77, %v260
    %v288 = vadd.f32 %v78, %v263
    %v289 = vadd.f32 %v79, %v266
    %v290 = vadd.f32 %v80, %v269
    %v291 = vadd.f32 %v81, %v272
    %v292 = vadd.f32 %v82, %v275
    %293 = vst [vmem:[#allocation2] sm:$0xff] %v277
    %294 = vst [vmem:[#allocation2 + $0x8] sm:$0xff] %v278
    %295 = vst [vmem:[#allocation2 + $0x10] sm:$0xff] %v279
    %296 = vst [vmem:[#allocation2 + $0x18] sm:$0xff] %v280
    %297 = vst [vmem:[#allocation2 + $0x20] sm:$0xff] %v281
    %298 = vst [vmem:[#allocation2 + $0x28] sm:$0xff] %v282
    %299 = vst [vmem:[#allocation2 + $0x30] sm:$0xff] %v283
    %300 = vst [vmem:[#allocation2 + $0x38] sm:$0xff] %v284
    %301 = vst [vmem:[#allocation2 + $0x40] sm:$0xff] %v285
    %302 = vst [vmem:[#allocation2 + $0x48] sm:$0xff] %v286
    %303 = vst [vmem:[#allocation2 + $0x50] sm:$0xff] %v287
    %304 = vst [vmem:[#allocation2 + $0x58] sm:$0xff] %v288
    %305 = vst [vmem:[#allocation2 + $0x60] sm:$0xff] %v289
    %306 = vst [vmem:[#allocation2 + $0x68] sm:$0xff] %v290
    %307 = vst [vmem:[#allocation2 + $0x70] sm:$0xff] %v291
    %308 = vst [vmem:[#allocation2 + $0x78] sm:$0xff] %v292
    // Predicated region
    $region26: #{tpu_custom_call.1} parent=1 // pred_check
      %p309 = pneg %p47
    $region27: #{tpu_custom_call.1} parent=1 // pred_check_branch
      %311 = sbr.rel (%p309) target = $region29
    $region28: #{tpu_custom_call.1} parent=1 // pred_region
      %v312 = vld [vmem:[#allocation2] sm:$0xff]
      %v313 = vld [vmem:[#allocation2 + $0x8] sm:$0xff]
      %v314 = vld [vmem:[#allocation2 + $0x10] sm:$0xff]
      %v315 = vld [vmem:[#allocation2 + $0x18] sm:$0xff]
      %v316 = vld [vmem:[#allocation2 + $0x20] sm:$0xff]
      %v317 = vld [vmem:[#allocation2 + $0x28] sm:$0xff]
      %v318 = vld [vmem:[#allocation2 + $0x30] sm:$0xff]
      %v319 = vld [vmem:[#allocation2 + $0x38] sm:$0xff]
      %v320 = vld [vmem:[#allocation2 + $0x40] sm:$0xff]
      %v321 = vld [vmem:[#allocation2 + $0x48] sm:$0xff]
      %v322 = vld [vmem:[#allocation2 + $0x50] sm:$0xff]
      %v323 = vld [vmem:[#allocation2 + $0x58] sm:$0xff]
      %v324 = vld [vmem:[#allocation2 + $0x60] sm:$0xff]
      %v325 = vld [vmem:[#allocation2 + $0x68] sm:$0xff]
      %v326 = vld [vmem:[#allocation2 + $0x70] sm:$0xff]
      %v327 = vld [vmem:[#allocation2 + $0x78] sm:$0xff]
      %v328 = vld [vmem:[%s2] sm:$0x1]
      %v330 = vperm.slane %v328, 0
      %v332 = vadd.f32 %v312, %v330
      %v333 = vadd.f32 %v313, %v330
      %v334 = vadd.f32 %v314, %v330
      %v335 = vadd.f32 %v315, %v330
      %v336 = vadd.f32 %v316, %v330
      %v337 = vadd.f32 %v317, %v330
      %v338 = vadd.f32 %v318, %v330
      %v339 = vadd.f32 %v319, %v330
      %v340 = vadd.f32 %v320, %v330
      %v341 = vadd.f32 %v321, %v330
      %v342 = vadd.f32 %v322, %v330
      %v343 = vadd.f32 %v323, %v330
      %v344 = vadd.f32 %v324, %v330
      %v345 = vadd.f32 %v325, %v330
      %v346 = vadd.f32 %v326, %v330
      %v347 = vadd.f32 %v327, %v330
      %348 = vst [vmem:[#allocation8] sm:$0xff] %v332
      %349 = vst [vmem:[#allocation8 + $0x8] sm:$0xff] %v333
      %350 = vst [vmem:[#allocation8 + $0x10] sm:$0xff] %v334
      %351 = vst [vmem:[#allocation8 + $0x18] sm:$0xff] %v335
      %352 = vst [vmem:[#allocation8 + $0x20] sm:$0xff] %v336
      %353 = vst [vmem:[#allocation8 + $0x28] sm:$0xff] %v337
      %354 = vst [vmem:[#allocation8 + $0x30] sm:$0xff] %v338
      %355 = vst [vmem:[#allocation8 + $0x38] sm:$0xff] %v339
      %356 = vst [vmem:[#allocation8 + $0x40] sm:$0xff] %v340
      %357 = vst [vmem:[#allocation8 + $0x48] sm:$0xff] %v341
      %358 = vst [vmem:[#allocation8 + $0x50] sm:$0xff] %v342
      %359 = vst [vmem:[#allocation8 + $0x58] sm:$0xff] %v343
      %360 = vst [vmem:[#allocation8 + $0x60] sm:$0xff] %v344
      %361 = vst [vmem:[#allocation8 + $0x68] sm:$0xff] %v345
      %362 = vst [vmem:[#allocation8 + $0x70] sm:$0xff] %v346
      %363 = vst [vmem:[#allocation8 + $0x78] sm:$0xff] %v347
    $region29: #{tpu_custom_call.1} parent=1 // pred_fallthru
      _
    // Predicated region
    $region30: #{tpu_custom_call.1} parent=1 // pred_check
      _
    $region31: #{tpu_custom_call.1} parent=1 // pred_check_branch
      %365 = sbr.rel (0) target = $region33
    $region32: #{tpu_custom_call.1} parent=1 // pred_region
      %367 = vsyncadd [#allocation5], 0
      %s368 = sshll.u32 [#allocation8], 4
      %s369 = int_to_ptr.vmem [resolvable:$true] %s368
      %s370 = sshll.u32 %s3, 4
      %s371 = int_to_ptr.hbm [resolvable:$true] %s370
      %376 = dma.vmem_to_hbm [thread:$0]  %s369, 2048, %s371, [#allocation5], 128, 128, 8
    $region33: #{tpu_custom_call.1} parent=1 // pred_fallthru
      _
    // Predicated region
    $region34: #{tpu_custom_call.1} parent=1 // pred_check
      _
    $region35: #{tpu_custom_call.1} parent=1 // pred_check_branch
      %378 = sbr.rel (0) target = $region37
    $region36: #{tpu_custom_call.1} parent=1 // pred_region
      %380 = dma.done [#allocation5], 2048
    $region37: #{tpu_custom_call.1} parent=1 // pred_fallthru
      _
    %381 = vsyncpa [#allocation4], 1
    %382 = vsyncpa [#allocation7], 1
    %383 = vsyncpa [#allocation5], 1

</llo_original>
